<compile_context>
chip_gen: v7x
topology: tpu7x:2x2x1
jax: 0.10.0
libtpu: 0.0.40
codegen_flags: <defaults>
</compile_context>

<pallas_src>
import jax
import jax.numpy as jnp
from jax.experimental import pallas as pl
from jax.experimental.pallas import tpu as pltpu

# ---- model dims (match the PyTorch module defaults) --------------------------
INPUT_SIZE = 5
HIDDEN_SIZE = 16
OUTPUT_SIZE = 2

# ---- padded, hardware-friendly dims ------------------------------------------
LANE = 128            # TPU lane width
K1P = 8               # rows reserved for fc1 weight in the slab (f32 sublane tile)
HP = LANE             # hidden padded to full lane width (lane-dense matmuls)
OP_SMALL = 8          # output lanes actually written to HBM (>= OUTPUT_SIZE)

# Row layout of the packed f32 weight slab (all offsets are multiples of 8 so
# slices stay sublane-aligned).
W1_OFF = 0                  # rows [0, 8)     : fc1 weight (5 used, HP lanes)
W3_OFF = K1P                # rows [8, 136)   : fc3 weight (HP, HP)
W2_OFF = K1P + HP           # rows [136, 264) : fc2 weight (HP, OP in first lanes)
W_ROWS = K1P + 2 * HP       # 264
B_ROWS = 8                  # f32 bias slab rows: b1, b3, b2, padding


def dqn_kernel(x_ref, w_ref, b_ref, o_ref):
    x = x_ref[...]                                         # (Bt, 5) f32

    w1 = w_ref[W1_OFF:W1_OFF + INPUT_SIZE, :]              # (5, HP)  f32
    w3 = w_ref[W3_OFF:W3_OFF + HP, :]                      # (HP, HP) f32
    w2 = w_ref[W2_OFF:W2_OFF + HP, :]                      # (HP, HP) f32 (2 cols used)

    # fc1 + ReLU (f32 MXU accumulate; Mosaic zero-pads the K=5 contraction)
    h = jnp.dot(x, w1, preferred_element_type=jnp.float32)         # (Bt, HP)
    h = jnp.maximum(h + b_ref[0:1, :], 0.0)

    # fc3 + ReLU
    h = jnp.dot(h, w3, preferred_element_type=jnp.float32)
    h = jnp.maximum(h + b_ref[1:2, :], 0.0)

    # fc2
    out = jnp.dot(h, w2, preferred_element_type=jnp.float32) + b_ref[2:3, :]

    # Store only the first OP_SMALL lanes -> (Bt, 8) HBM writeback, not (Bt, 128).
    o_ref[...] = out[:, :OP_SMALL].astype(o_ref.dtype)


def pack_params(params):
    """Pack (w1,b1,w3,b3,w2,b2) into one f32 weight slab + one f32 bias slab."""
    w1, b1, w3, b3, w2, b2 = params
    w_slab = jnp.zeros((W_ROWS, LANE), jnp.float32)
    w_slab = w_slab.at[W1_OFF:W1_OFF + INPUT_SIZE, :HIDDEN_SIZE].set(w1)
    w_slab = w_slab.at[W3_OFF:W3_OFF + HIDDEN_SIZE, :HIDDEN_SIZE].set(w3)
    w_slab = w_slab.at[W2_OFF:W2_OFF + HIDDEN_SIZE, :OUTPUT_SIZE].set(w2)

    b_slab = jnp.zeros((B_ROWS, LANE), jnp.float32)
    b_slab = b_slab.at[0, :HIDDEN_SIZE].set(b1[0])
    b_slab = b_slab.at[1, :HIDDEN_SIZE].set(b3[0])
    b_slab = b_slab.at[2, :OUTPUT_SIZE].set(b2[0])
    return w_slab, b_slab


def _round_up(n, m):
    return ((n + m - 1) // m) * m


def dqn_forward(x, packed_params, *, block_b=None):
    w_slab, b_slab = packed_params
    B = x.shape[0]
    x = x.astype(jnp.float32)

    # Batch tile selection:
    #  * multiple of 8 (sublane),
    #  * capped at 1024 rows (amortizes per-grid-step overhead, ~85%+ of roofline),
    #  * at least 2 grid steps whenever the batch allows it, so v7x's second
    #    TensorCore is not idle under dimension_semantics=("parallel",).
    if block_b is None:
        TILE = 1024
        half = _round_up(max(1, (B + 1) // 2), 8)
        block_b = max(8, min(TILE, half))

    grid = (pl.cdiv(B, block_b),)  # ragged last block: OOB reads discarded rows,
                                   # OOB writes masked by Pallas.

    out = pl.pallas_call(
        dqn_kernel,
        out_shape=jax.ShapeDtypeStruct((B, OP_SMALL), jnp.float32),
        grid_spec=pltpu.PrefetchScalarGridSpec(
            num_scalar_prefetch=0,
            grid=grid,
            in_specs=[
                # x: tiled on batch; last dim == full array dim (5) so legal.
                pl.BlockSpec((block_b, INPUT_SIZE), lambda i: (i, 0)),
                # weights / biases: constant block index -> resident in VMEM.
                pl.BlockSpec((W_ROWS, LANE), lambda i: (0, 0)),
                pl.BlockSpec((B_ROWS, LANE), lambda i: (0, 0)),
            ],
            out_specs=pl.BlockSpec((block_b, OP_SMALL), lambda i: (i, 0)),
        ),
        compiler_params=pltpu.CompilerParams(
            dimension_semantics=("parallel",)),
    )(x, w_slab, b_slab)

    return out[:, :OUTPUT_SIZE]


def init_params(key, input_size=5, hidden_size=16, output_size=2):
    """Deterministic init mimicking nn.Linear's U(-1/sqrt(fan_in), 1/sqrt(fan_in))."""
    def linear_init(k, fan_in, fan_out):
        kw, kb = jax.random.split(k)
        bound = 1.0 / jnp.sqrt(jnp.float32(fan_in))
        w = jax.random.uniform(kw, (fan_in, fan_out), jnp.float32, -bound, bound)
        b = jax.random.uniform(kb, (1, fan_out), jnp.float32, -bound, bound)
        return w, b

    k1, k2, k3 = jax.random.split(key, 3)
    w1, b1 = linear_init(k1, input_size, hidden_size)   # fc1
    w2, b2 = linear_init(k2, hidden_size, output_size)  # fc2
    w3, b3 = linear_init(k3, hidden_size, hidden_size)  # fc3
    return (w1, b1, w3, b3, w2, b2)


if __name__ == "__main__":
    key = jax.random.PRNGKey(0)
    kx, kp, kx2 = jax.random.split(key, 3)

    batch = 8
    x = jax.random.normal(kx, (batch, INPUT_SIZE), dtype=jnp.float32)
    params = init_params(kp, INPUT_SIZE, HIDDEN_SIZE, OUTPUT_SIZE)
    packed = pack_params(params)

    out = jax.block_until_ready(dqn_forward(x, packed))
    assert out.shape == (batch, OUTPUT_SIZE)
    assert bool(jnp.all(jnp.isfinite(out)))

    # Pure-JAX f32 reference.
    def ref_f32(xv):
        w1, b1, w3, b3, w2, b2 = params
        h = jnp.maximum(xv @ w1 + b1, 0.0)
        h = jnp.maximum(h @ w3 + b3, 0.0)
        return h @ w2 + b2

    # f32 matmuls in-kernel -> close parity (tolerance covers MXU pass rounding).
    assert jnp.allclose(out, ref_f32(x), atol=2e-2, rtol=2e-2)

    # Exercise the multi-step + ragged grid path (2 grid steps, partial last block).
    x2 = jax.random.normal(kx2, (300, INPUT_SIZE), dtype=jnp.float32)
    out2 = jax.block_until_ready(dqn_forward(x2, packed))
    assert out2.shape == (300, OUTPUT_SIZE)
    assert jnp.allclose(out2, ref_f32(x2), atol=2e-2, rtol=2e-2)

    print("KERNEL_OK")
</pallas_src>

<mosaic_0001>
module attributes {stable_mosaic.version = 11 : i64} {
  func.func @dqn_kernel(%arg0: i32, %arg1: memref<8x5xf32, #tpu.memory_space<vmem>>, %arg2: memref<264x128xf32, #tpu.memory_space<vmem>>, %arg3: memref<8x128xf32, #tpu.memory_space<vmem>>, %arg4: memref<8x8xf32, #tpu.memory_space<vmem>>) attributes {dimension_semantics = [#tpu.dimension_semantics<parallel>], iteration_bounds = array<i64: 1>, scalar_prefetch = 0 : i64, scratch_operands = 0 : i64, tpu.core_type = #tpu.core_type<tc>, window_params = [{transform_indices = @transform_0, window_bounds = array<i64: 8, 5>}, {pipeline_mode = #tpu.pipeline_mode<synchronous>, transform_indices = @transform_1, window_bounds = array<i64: 264, 128>}, {pipeline_mode = #tpu.pipeline_mode<synchronous>, transform_indices = @transform_2, window_bounds = array<i64: 8, 128>}, {transform_indices = @transform_3, window_bounds = array<i64: 8, 8>}]} {
    %c0 = arith.constant 0 : index
    %c0_0 = arith.constant 0 : index
    %0 = vector.load %arg1[%c0, %c0_0] : memref<8x5xf32, #tpu.memory_space<vmem>>, vector<8x5xf32>
    %c0_1 = arith.constant 0 : index
    %c0_2 = arith.constant 0 : index
    %1 = vector.load %arg2[%c0_1, %c0_2] : memref<264x128xf32, #tpu.memory_space<vmem>>, vector<5x128xf32>
    %c8 = arith.constant 8 : index
    %c0_3 = arith.constant 0 : index
    %2 = vector.load %arg2[%c8, %c0_3] : memref<264x128xf32, #tpu.memory_space<vmem>>, vector<128x128xf32>
    %c136 = arith.constant 136 : index
    %c0_4 = arith.constant 0 : index
    %3 = vector.load %arg2[%c136, %c0_4] : memref<264x128xf32, #tpu.memory_space<vmem>>, vector<128x128xf32>
    %cst = arith.constant dense<0.000000e+00> : vector<8x128xf32>
    %4 = tpu.matmul %0, %1, %cst {dimension_numbers = #tpu.dot_dimension_numbers<[1], [0], [0], [1], [0, 0, 1, 1], [], []>} : vector<8x5xf32>, vector<5x128xf32>, vector<8x128xf32> -> vector<8x128xf32>
    %c0_5 = arith.constant 0 : index
    %c0_6 = arith.constant 0 : index
    %5 = vector.load %arg3[%c0_5, %c0_6] : memref<8x128xf32, #tpu.memory_space<vmem>>, vector<1x128xf32>
    %6 = vector.broadcast %5 : vector<1x128xf32> to vector<8x128xf32>
    %7 = arith.addf %4, %6 : vector<8x128xf32>
    %cst_7 = arith.constant 0.000000e+00 : f32
    %8 = vector.broadcast %cst_7 : f32 to vector<8x128xf32>
    %9 = arith.maximumf %7, %8 : vector<8x128xf32>
    %cst_8 = arith.constant dense<0.000000e+00> : vector<8x128xf32>
    %10 = tpu.matmul %9, %2, %cst_8 {dimension_numbers = #tpu.dot_dimension_numbers<[1], [0], [0], [1], [0, 0, 1, 1], [], []>} : vector<8x128xf32>, vector<128x128xf32>, vector<8x128xf32> -> vector<8x128xf32>
    %c1 = arith.constant 1 : index
    %c0_9 = arith.constant 0 : index
    %11 = vector.load %arg3[%c1, %c0_9] : memref<8x128xf32, #tpu.memory_space<vmem>>, vector<1x128xf32>
    %12 = vector.broadcast %11 : vector<1x128xf32> to vector<8x128xf32>
    %13 = arith.addf %10, %12 : vector<8x128xf32>
    %cst_10 = arith.constant 0.000000e+00 : f32
    %14 = vector.broadcast %cst_10 : f32 to vector<8x128xf32>
    %15 = arith.maximumf %13, %14 : vector<8x128xf32>
    %cst_11 = arith.constant dense<0.000000e+00> : vector<8x128xf32>
    %16 = tpu.matmul %15, %3, %cst_11 {dimension_numbers = #tpu.dot_dimension_numbers<[1], [0], [0], [1], [0, 0, 1, 1], [], []>} : vector<8x128xf32>, vector<128x128xf32>, vector<8x128xf32> -> vector<8x128xf32>
    %c2 = arith.constant 2 : index
    %c0_12 = arith.constant 0 : index
    %17 = vector.load %arg3[%c2, %c0_12] : memref<8x128xf32, #tpu.memory_space<vmem>>, vector<1x128xf32>
    %18 = vector.broadcast %17 : vector<1x128xf32> to vector<8x128xf32>
    %19 = arith.addf %16, %18 : vector<8x128xf32>
    %20 = vector.extract_strided_slice %19 {offsets = [0, 0], sizes = [8, 8], strides = [1, 1]} : vector<8x128xf32> to vector<8x8xf32>
    %c0_13 = arith.constant 0 : index
    %c0_14 = arith.constant 0 : index
    %21 = vector.load %arg4[%c0_13, %c0_14] : memref<8x8xf32, #tpu.memory_space<vmem>>, vector<8x8xf32>
    tpu.vector_store %arg4[%c0_13, %c0_14], %20 {strides = array<i32>} : memref<8x8xf32, #tpu.memory_space<vmem>>, vector<8x8xf32>,
    return
  }
  func.func @transform_0(%arg0: i32) -> (i32, i32) {
    %c0_i32 = arith.constant 0 : i32
    %c0_i32_0 = arith.constant 0 : i32
    return %arg0, %c0_i32 : i32, i32
  }
  func.func @transform_1(%arg0: i32) -> (i32, i32) {
    %c0_i32 = arith.constant 0 : i32
    %c0_i32_0 = arith.constant 0 : i32
    %c0_i32_1 = arith.constant 0 : i32
    return %c0_i32, %c0_i32_0 : i32, i32
  }
  func.func @transform_2(%arg0: i32) -> (i32, i32) {
    %c0_i32 = arith.constant 0 : i32
    %c0_i32_0 = arith.constant 0 : i32
    %c0_i32_1 = arith.constant 0 : i32
    return %c0_i32, %c0_i32_0 : i32, i32
  }
  func.func @transform_3(%arg0: i32) -> (i32, i32) {
    %c0_i32 = arith.constant 0 : i32
    %c0_i32_0 = arith.constant 0 : i32
    return %arg0, %c0_i32 : i32, i32
  }
}

</mosaic_0001>

<llo_original>
// kernel: tpu_custom_call.1
$region0: #{tpu_custom_call.1}
  #allocation0 [shape = 'u32[]', space=smem, size = 0x4, offset = 0x4, fixed_abs, tag = 'smem constant byte address 0x4 - core index']
  #allocation1 [shape = 'u32[144,128]{1,0:T(1,128)}', space=vmem, size = 0x12000, scoped, tag = 'internal scratch']
  %s0 = inlined_call_operand.hbm [shape: f32[8,5], index: 0, kind: input, shape index: {}]
  %s1 = inlined_call_operand.hbm [shape: f32[264,128], index: 1, kind: input, shape index: {}]
  %s2 = inlined_call_operand.hbm [shape: f32[8,128], index: 2, kind: input, shape index: {}]
  %s3 = inlined_call_operand.hbm [shape: f32[8,8], index: 3, kind: output, shape index: {}]
  %s4 = sld [smem:[#allocation0]]
  $region34: #{tpu_custom_call.1} parent=0
    _
  %s6 = ssub.s32 1, %s4
  %s7 = scalar_select 0, %s6, %s4
  $region1: #{tpu_custom_call.1} parent=0
    #allocation2 [shape = 'u8[4096]{0}', space=vmem, size = 0x1000, scoped, tag = 'input window, operand 0, single buffered']
    #allocation3 [shape = 's32[1]{0}', space=sflag, size = 0x4, scoped, tag = 'scoped memory for tpu_custom_call.1']
    #allocation4 [shape = 's32[1]{0}', space=sflag, size = 0x4, scoped, tag = 'scoped memory for tpu_custom_call.1']
    #allocation5 [shape = 'u8[135168]{0}', space=vmem, size = 0x21000, scoped, tag = 'input window, operand 1, single buffered']
    #allocation6 [shape = 's32[1]{0}', space=sflag, size = 0x4, scoped, tag = 'scoped memory for tpu_custom_call.1']
    #allocation7 [shape = 'u8[4096]{0}', space=vmem, size = 0x1000, scoped, tag = 'input window, operand 2, single buffered']
    #allocation8 [shape = 'u8[4096]{0}', space=vmem, size = 0x1000, scoped, tag = 'output window, operand 0, single buffered']
    %8 = vsyncpa [#allocation3], 0
    %9 = vsyncpa [#allocation6], 0
    %10 = vsyncpa [#allocation4], 0
    // Predicated region
    $region2: #{tpu_custom_call.1} parent=1 // pred_check
      _
    $region3: #{tpu_custom_call.1} parent=1 // pred_check_branch
      %12 = sbr.rel (0) target = $region5
    $region4: #{tpu_custom_call.1} parent=1 // pred_region
      %s14 = ssub.s32 128, 128
      %15 = vsyncadd [#allocation3], %s14
      %s17 = sshll.u32 [#allocation2], 4
      %s18 = int_to_ptr.vmem [resolvable:$true] %s17
      %20 = dma.hbm_to_vmem [thread:$0]  %s0, 128, %s18, [#allocation3]
    $region5: #{tpu_custom_call.1} parent=1 // pred_fallthru
      _
    // Predicated region
    $region6: #{tpu_custom_call.1} parent=1 // pred_check
      _
    $region7: #{tpu_custom_call.1} parent=1 // pred_check_branch
      %22 = sbr.rel (0) target = $region9
    $region8: #{tpu_custom_call.1} parent=1 // pred_region
      %s24 = ssub.s32 4224, 4224
      %25 = vsyncadd [#allocation6], %s24
      %s26 = sshll.u32 [#allocation5], 4
      %s27 = int_to_ptr.vmem [resolvable:$true] %s26
      %32 = dma.hbm_to_vmem [thread:$0]  %s1, 4224, %s27, [#allocation6], 128, 128, 8
    $region9: #{tpu_custom_call.1} parent=1 // pred_fallthru
      _
    // Predicated region
    $region10: #{tpu_custom_call.1} parent=1 // pred_check
      _
    $region11: #{tpu_custom_call.1} parent=1 // pred_check_branch
      %34 = sbr.rel (0) target = $region13
    $region12: #{tpu_custom_call.1} parent=1 // pred_region
      %s36 = ssub.s32 128, 128
      %37 = vsyncadd [#allocation6], %s36
      %s39 = sshll.u32 [#allocation7], 4
      %s40 = int_to_ptr.vmem [resolvable:$true] %s39
      %42 = dma.hbm_to_vmem [thread:$0]  %s2, 128, %s40, [#allocation6]
    $region13: #{tpu_custom_call.1} parent=1 // pred_fallthru
      _
    // Predicated region
    $region14: #{tpu_custom_call.1} parent=1 // pred_check
      _
    $region15: #{tpu_custom_call.1} parent=1 // pred_check_branch
      %44 = sbr.rel (0) target = $region17
    $region16: #{tpu_custom_call.1} parent=1 // pred_region
      %45 = dma.done [#allocation3], 128
    $region17: #{tpu_custom_call.1} parent=1 // pred_fallthru
      _
    // Predicated region
    $region18: #{tpu_custom_call.1} parent=1 // pred_check
      _
    $region19: #{tpu_custom_call.1} parent=1 // pred_check_branch
      %47 = sbr.rel (0) target = $region21
    $region20: #{tpu_custom_call.1} parent=1 // pred_region
      %48 = dma.done [#allocation6], 4224
    $region21: #{tpu_custom_call.1} parent=1 // pred_fallthru
      _
    // Predicated region
    $region22: #{tpu_custom_call.1} parent=1 // pred_check
      _
    $region23: #{tpu_custom_call.1} parent=1 // pred_check_branch
      %50 = sbr.rel (0) target = $region25
    $region24: #{tpu_custom_call.1} parent=1 // pred_region
      %51 = dma.done [#allocation6], 128
    $region25: #{tpu_custom_call.1} parent=1 // pred_fallthru
      _
    %v52 = vld [vmem:[#allocation2] sm:$0xff]
    %v53 = vld [vmem:[#allocation5] sm:$0x1f]
    %v54 = vld [vmem:[#allocation5 + $0x8] sm:$0xff]
    %v55 = vld [vmem:[#allocation5 + $0x10] sm:$0xff]
    %v56 = vld [vmem:[#allocation5 + $0x18] sm:$0xff]
    %v57 = vld [vmem:[#allocation5 + $0x20] sm:$0xff]
    %v58 = vld [vmem:[#allocation5 + $0x28] sm:$0xff]
    %v59 = vld [vmem:[#allocation5 + $0x30] sm:$0xff]
    %v60 = vld [vmem:[#allocation5 + $0x38] sm:$0xff]
    %v61 = vld [vmem:[#allocation5 + $0x40] sm:$0xff]
    %v62 = vld [vmem:[#allocation5 + $0x48] sm:$0xff]
    %v63 = vld [vmem:[#allocation5 + $0x50] sm:$0xff]
    %v64 = vld [vmem:[#allocation5 + $0x58] sm:$0xff]
    %v65 = vld [vmem:[#allocation5 + $0x60] sm:$0xff]
    %v66 = vld [vmem:[#allocation5 + $0x68] sm:$0xff]
    %v67 = vld [vmem:[#allocation5 + $0x70] sm:$0xff]
    %v68 = vld [vmem:[#allocation5 + $0x78] sm:$0xff]
    %v69 = vld [vmem:[#allocation5 + $0x80] sm:$0xff]
    %v70 = vld [vmem:[#allocation5 + $0x88] sm:$0xff]
    %v71 = vld [vmem:[#allocation5 + $0x90] sm:$0xff]
    %v72 = vld [vmem:[#allocation5 + $0x98] sm:$0xff]
    %v73 = vld [vmem:[#allocation5 + $0xa0] sm:$0xff]
    %v74 = vld [vmem:[#allocation5 + $0xa8] sm:$0xff]
    %v75 = vld [vmem:[#allocation5 + $0xb0] sm:$0xff]
    %v76 = vld [vmem:[#allocation5 + $0xb8] sm:$0xff]
    %v77 = vld [vmem:[#allocation5 + $0xc0] sm:$0xff]
    %v78 = vld [vmem:[#allocation5 + $0xc8] sm:$0xff]
    %v79 = vld [vmem:[#allocation5 + $0xd0] sm:$0xff]
    %v80 = vld [vmem:[#allocation5 + $0xd8] sm:$0xff]
    %v81 = vld [vmem:[#allocation5 + $0xe0] sm:$0xff]
    %v82 = vld [vmem:[#allocation5 + $0xe8] sm:$0xff]
    %v83 = vld [vmem:[#allocation5 + $0xf0] sm:$0xff]
    %v84 = vld [vmem:[#allocation5 + $0xf8] sm:$0xff]
    %v85 = vld [vmem:[#allocation5 + $0x100] sm:$0xff]
    %v86 = vld [vmem:[#allocation7] sm:$0x1]
    %v87 = vlaneseq
    %v88 = vshrl.u32 %v87, 7
    %v89 = vsub.s32 0, %v88
    %v90 = vrot.slane %v86, %v89
    %vm91 = vcmask 39936
    %v93 = vsel %vm91, %v52, 0
    %vm95 = vcmask 1044480
    %v97 = vsel %vm95, %v53, 0
    %99 = vmatprep.subr.mxu0 0.0
    %100 = vmatpush1.msra.mxu0 %v97
    %101 = vmatprep.subr.mxu0 0.0
    %102 = vmatpush1.msra.mxu0 0.0
    %103 = vmatprep.subr.mxu0 0.0
    %104 = vmatpush1.msra.mxu0 0.0
    %105 = vmatprep.subr.mxu0 0.0
    %106 = vmatpush1.msra.mxu0 0.0
    %107 = vmatprep.subr.mxu0 0.0
    %108 = vmatpush1.msra.mxu0 0.0
    %109 = vmatprep.subr.mxu0 0.0
    %110 = vmatpush1.msra.mxu0 0.0
    %111 = vmatprep.subr.mxu0 0.0
    %112 = vmatpush1.msra.mxu0 0.0
    %113 = vmatprep.subr.mxu0 0.0
    %114 = vmatpush1.msra.mxu0 0.0
    %115 = vmatprep.subr.mxu0 0.0
    %116 = vmatpush1.msra.mxu0 0.0
    %117 = vmatprep.subr.mxu0 0.0
    %118 = vmatpush1.msra.mxu0 0.0
    %119 = vmatprep.subr.mxu0 0.0
    %120 = vmatpush1.msra.mxu0 0.0
    %121 = vmatprep.subr.mxu0 0.0
    %122 = vmatpush1.msra.mxu0 0.0
    %123 = vmatprep.subr.mxu0 0.0
    %124 = vmatpush1.msra.mxu0 0.0
    %125 = vmatprep.subr.mxu0 0.0
    %126 = vmatpush1.msra.mxu0 0.0
    %127 = vmatprep.subr.mxu0 0.0
    %128 = vmatpush1.msra.mxu0 0.0
    %129 = vmatprep.subr.mxu0 0.0
    %130 = vmatpush1.msra.mxu0 0.0
    %131 = vmatprep.subr.mxu0 0.0
    %132 = vmatpush1.msra.mxu0 0.0
    %133 = vmatprep.subr.mxu0 0.0
    %134 = vmatpush1.msra.mxu0 0.0
    %135 = vmatprep.subr.mxu0 0.0
    %136 = vmatpush1.msra.mxu0 0.0
    %137 = vmatprep.subr.mxu0 0.0
    %138 = vmatpush1.msra.mxu0 0.0
    %139 = vmatprep.subr.mxu0 0.0
    %140 = vmatpush1.msra.mxu0 0.0
    %141 = vmatprep.subr.mxu0 0.0
    %142 = vmatpush1.msra.mxu0 0.0
    %143 = vmatprep.subr.mxu0 0.0
    %144 = vmatpush1.msra.mxu0 0.0
    %145 = vmatprep.subr.mxu0 0.0
    %146 = vmatpush1.msra.mxu0 0.0
    %147 = vmatprep.subr.mxu0 0.0
    %148 = vmatpush1.msra.mxu0 0.0
    %149 = vmatprep.subr.mxu0 0.0
    %150 = vmatpush1.msra.mxu0 0.0
    %151 = vmatprep.subr.mxu0 0.0
    %152 = vmatpush1.msra.mxu0 0.0
    %153 = vmatprep.subr.mxu0 0.0
    %154 = vmatpush1.msra.mxu0 0.0
    %155 = vmatprep.subr.mxu0 0.0
    %156 = vmatpush1.msra.mxu0 0.0
    %157 = vmatprep.subr.mxu0 0.0
    %158 = vmatpush1.msra.mxu0 0.0
    %159 = vmatprep.subr.mxu0 0.0
    %160 = vmatpush1.msra.mxu0 0.0
    %161 = vmatprep.subr.mxu0 0.0
    %162 = vmatpush1.msra.mxu0 0.0
    %163 = vmatprep.mubr.f32.mxu0 0.0
    %164 = vmatmul.mubr.f32.gmra.mrb[0].mxu0 %v93
    %v165 = vpop.f32.mrb[0].mxu0
    %v166 = vadd.f32 %v90, %v165
    %v167 = vpop.f32.mrb[0].mxu0
    %168 = vdwg.mxu0
    %v169 = vmax.f32 %v166, 0.0
    %v170 = vld [vmem:[#allocation7 + $0x1] sm:$0x1]
    %v171 = vlaneseq
    %v172 = vshrl.u32 %v171, 7
    %v173 = vsub.s32 0, %v172
    %v174 = vrot.slane %v170, %v173
    %175 = vmatprep.subr.mxu0 0.0
    %176 = vmatpush1.msra.mxu0 %v54
    %177 = vmatprep.subr.mxu0 0.0
    %178 = vmatpush1.msra.mxu0 %v55
    %179 = vmatprep.subr.mxu0 0.0
    %180 = vmatpush1.msra.mxu0 %v56
    %181 = vmatprep.subr.mxu0 0.0
    %182 = vmatpush1.msra.mxu0 %v57
    %183 = vmatprep.subr.mxu0 0.0
    %184 = vmatpush1.msra.mxu0 %v58
    %185 = vmatprep.subr.mxu0 0.0
    %186 = vmatpush1.msra.mxu0 %v59
    %187 = vmatprep.subr.mxu0 0.0
    %188 = vmatpush1.msra.mxu0 %v60
    %189 = vmatprep.subr.mxu0 0.0
    %190 = vmatpush1.msra.mxu0 %v61
    %191 = vmatprep.subr.mxu0 0.0
    %192 = vmatpush1.msra.mxu0 %v62
    %193 = vmatprep.subr.mxu0 0.0
    %194 = vmatpush1.msra.mxu0 %v63
    %195 = vmatprep.subr.mxu0 0.0
    %196 = vmatpush1.msra.mxu0 %v64
    %197 = vmatprep.subr.mxu0 0.0
    %198 = vmatpush1.msra.mxu0 %v65
    %199 = vmatprep.subr.mxu0 0.0
    %200 = vmatpush1.msra.mxu0 %v66
    %201 = vmatprep.subr.mxu0 0.0
    %202 = vmatpush1.msra.mxu0 %v67
    %203 = vmatprep.subr.mxu0 0.0
    %204 = vmatpush1.msra.mxu0 %v68
    %205 = vmatprep.subr.mxu0 0.0
    %206 = vmatpush1.msra.mxu0 %v69
    %207 = vmatprep.subr.mxu0 0.0
    %208 = vmatpush1.msra.mxu0 0.0
    %209 = vmatprep.subr.mxu0 0.0
    %210 = vmatpush1.msra.mxu0 0.0
    %211 = vmatprep.subr.mxu0 0.0
    %212 = vmatpush1.msra.mxu0 0.0
    %213 = vmatprep.subr.mxu0 0.0
    %214 = vmatpush1.msra.mxu0 0.0
    %215 = vmatprep.subr.mxu0 0.0
    %216 = vmatpush1.msra.mxu0 0.0
    %217 = vmatprep.subr.mxu0 0.0
    %218 = vmatpush1.msra.mxu0 0.0
    %219 = vmatprep.subr.mxu0 0.0
    %220 = vmatpush1.msra.mxu0 0.0
    %221 = vmatprep.subr.mxu0 0.0
    %222 = vmatpush1.msra.mxu0 0.0
    %223 = vmatprep.subr.mxu0 0.0
    %224 = vmatpush1.msra.mxu0 0.0
    %225 = vmatprep.subr.mxu0 0.0
    %226 = vmatpush1.msra.mxu0 0.0
    %227 = vmatprep.subr.mxu0 0.0
    %228 = vmatpush1.msra.mxu0 0.0
    %229 = vmatprep.subr.mxu0 0.0
    %230 = vmatpush1.msra.mxu0 0.0
    %231 = vmatprep.subr.mxu0 0.0
    %232 = vmatpush1.msra.mxu0 0.0
    %233 = vmatprep.subr.mxu0 0.0
    %234 = vmatpush1.msra.mxu0 0.0
    %235 = vmatprep.subr.mxu0 0.0
    %236 = vmatpush1.msra.mxu0 0.0
    %237 = vmatprep.subr.mxu0 0.0
    %238 = vmatpush1.msra.mxu0 0.0
    %239 = vmatprep.mubr.f32.mxu0 0.0
    %240 = vmatmul.mubr.f32.gmra.mrb[0].mxu0 %v169
    %v241 = vpop.f32.mrb[0].mxu0
    %v242 = vadd.f32 %v174, %v241
    %v243 = vpop.f32.mrb[0].mxu0
    %244 = vdwg.mxu0
    %v245 = vmax.f32 %v242, 0.0
    %v246 = vld [vmem:[#allocation7 + $0x2] sm:$0x1]
    %v247 = vlaneseq
    %v248 = vshrl.u32 %v247, 7
    %v249 = vsub.s32 0, %v248
    %v250 = vrot.slane %v246, %v249
    %251 = vmatprep.subr.mxu0 0.0
    %252 = vmatpush1.msra.mxu0 %v70
    %253 = vmatprep.subr.mxu0 0.0
    %254 = vmatpush1.msra.mxu0 %v71
    %255 = vmatprep.subr.mxu0 0.0
    %256 = vmatpush1.msra.mxu0 %v72
    %257 = vmatprep.subr.mxu0 0.0
    %258 = vmatpush1.msra.mxu0 %v73
    %259 = vmatprep.subr.mxu0 0.0
    %260 = vmatpush1.msra.mxu0 %v74
    %261 = vmatprep.subr.mxu0 0.0
    %262 = vmatpush1.msra.mxu0 %v75
    %263 = vmatprep.subr.mxu0 0.0
    %264 = vmatpush1.msra.mxu0 %v76
    %265 = vmatprep.subr.mxu0 0.0
    %266 = vmatpush1.msra.mxu0 %v77
    %267 = vmatprep.subr.mxu0 0.0
    %268 = vmatpush1.msra.mxu0 %v78
    %269 = vmatprep.subr.mxu0 0.0
    %270 = vmatpush1.msra.mxu0 %v79
    %271 = vmatprep.subr.mxu0 0.0
    %272 = vmatpush1.msra.mxu0 %v80
    %273 = vmatprep.subr.mxu0 0.0
    %274 = vmatpush1.msra.mxu0 %v81
    %275 = vmatprep.subr.mxu0 0.0
    %276 = vmatpush1.msra.mxu0 %v82
    %277 = vmatprep.subr.mxu0 0.0
    %278 = vmatpush1.msra.mxu0 %v83
    %279 = vmatprep.subr.mxu0 0.0
    %280 = vmatpush1.msra.mxu0 %v84
    %281 = vmatprep.subr.mxu0 0.0
    %282 = vmatpush1.msra.mxu0 %v85
    %283 = vmatprep.subr.mxu0 0.0
    %284 = vmatpush1.msra.mxu0 0.0
    %285 = vmatprep.subr.mxu0 0.0
    %286 = vmatpush1.msra.mxu0 0.0
    %287 = vmatprep.subr.mxu0 0.0
    %288 = vmatpush1.msra.mxu0 0.0
    %289 = vmatprep.subr.mxu0 0.0
    %290 = vmatpush1.msra.mxu0 0.0
    %291 = vmatprep.subr.mxu0 0.0
    %292 = vmatpush1.msra.mxu0 0.0
    %293 = vmatprep.subr.mxu0 0.0
    %294 = vmatpush1.msra.mxu0 0.0
    %295 = vmatprep.subr.mxu0 0.0
    %296 = vmatpush1.msra.mxu0 0.0
    %297 = vmatprep.subr.mxu0 0.0
    %298 = vmatpush1.msra.mxu0 0.0
    %299 = vmatprep.subr.mxu0 0.0
    %300 = vmatpush1.msra.mxu0 0.0
    %301 = vmatprep.subr.mxu0 0.0
    %302 = vmatpush1.msra.mxu0 0.0
    %303 = vmatprep.subr.mxu0 0.0
    %304 = vmatpush1.msra.mxu0 0.0
    %305 = vmatprep.subr.mxu0 0.0
    %306 = vmatpush1.msra.mxu0 0.0
    %307 = vmatprep.subr.mxu0 0.0
    %308 = vmatpush1.msra.mxu0 0.0
    %309 = vmatprep.subr.mxu0 0.0
    %310 = vmatpush1.msra.mxu0 0.0
    %311 = vmatprep.subr.mxu0 0.0
    %312 = vmatpush1.msra.mxu0 0.0
    %313 = vmatprep.subr.mxu0 0.0
    %314 = vmatpush1.msra.mxu0 0.0
    %315 = vmatprep.mubr.f32.mxu0 0.0
    %316 = vmatmul.mubr.f32.gmra.mrb[0].mxu0 %v245
    %v317 = vpop.f32.mrb[0].mxu0
    %v318 = vadd.f32 %v250, %v317
    %v319 = vpop.f32.mrb[0].mxu0
    %320 = vdwg.mxu0
    %vm321 = vcmask 64512
    %322 = vst.msk [vmem:[#allocation8] sm:$0xff] %vm321, %v318
    // Predicated region
    $region26: #{tpu_custom_call.1} parent=1 // pred_check
      _
    $region27: #{tpu_custom_call.1} parent=1 // pred_check_branch
      %324 = sbr.rel (0) target = $region29
    $region28: #{tpu_custom_call.1} parent=1 // pred_region
      %s326 = ssub.s32 128, 128
      %327 = vsyncadd [#allocation4], %s326
      %s329 = sshll.u32 [#allocation8], 4
      %s330 = int_to_ptr.vmem [resolvable:$true] %s329
      %332 = dma.vmem_to_hbm [thread:$0]  %s330, 128, %s3, [#allocation4]
    $region29: #{tpu_custom_call.1} parent=1 // pred_fallthru
      _
    // Predicated region
    $region30: #{tpu_custom_call.1} parent=1 // pred_check
      _
    $region31: #{tpu_custom_call.1} parent=1 // pred_check_branch
      %334 = sbr.rel (0) target = $region33
    $region32: #{tpu_custom_call.1} parent=1 // pred_region
      %335 = dma.done [#allocation4], 128
    $region33: #{tpu_custom_call.1} parent=1 // pred_fallthru
      _
    %336 = vsyncpa [#allocation3], 1
    %337 = vsyncpa [#allocation6], 1
    %338 = vsyncpa [#allocation4], 1

</llo_original>
